<compile_context>
chip_gen: v7x
topology: tpu7x:2x2x1
jax: 0.10.0
libtpu: 0.0.40
codegen_flags: <defaults>
</compile_context>

<pallas_src>
import jax
import jax.numpy as jnp
from jax.experimental import pallas as pl
from jax.experimental.pallas import tpu as pltpu

_LANE = 512


def _round_up(x, m):
    return ((x + m - 1) // m) * m


def _make_heatmap_sse_kernel(num_stages, tile_rows, lane):
    """Per-tile sum of squared differences, folded to an (8, lane) partial."""
    groups = tile_rows // 8

    def kernel(*refs):
        gt_ref = refs[0]
        hm_refs = refs[1:1 + num_stages]
        out_ref = refs[1 + num_stages]

        gt = gt_ref[...].astype(jnp.float32)                    # (tile_rows, lane)
        acc = jnp.zeros((tile_rows, lane), jnp.float32)
        for hm_ref in hm_refs:                                  # static unroll over stages
            d = hm_ref[...].astype(jnp.float32) - gt
            acc = acc + d * d
        # Fold sublane groups -> lane-dense (8, lane) partial via a pairwise tree:
        # cheap VPU adds, short dependency chain, and the cross-lane (XLU) reduction
        # stays out of the streaming kernel entirely.
        parts = [acc[g * 8:(g + 1) * 8, :] for g in range(groups)]
        while len(parts) > 1:
            nxt = [a + b for a, b in zip(parts[0::2], parts[1::2])]
            if len(parts) % 2:
                nxt.append(parts[-1])
            parts = nxt
        out_ref[...] = parts[0]

    return kernel


def _make_finalize_kernel(inv_heatmap_count):
    def kernel(gesture_ref, label_ref, lm_ref, lm_gt_ref, part_ref, out_ref):
        # ---- cross entropy over gesture logits (mean over batch) ----
        logits = gesture_ref[...].astype(jnp.float32)            # (N, C)
        labels = label_ref[...]                                   # (N, 1) int32
        n, c = logits.shape
        row_max = jnp.max(logits, axis=-1, keepdims=True)
        shifted = logits - row_max
        lse = jnp.log(jnp.sum(jnp.exp(shifted), axis=-1, keepdims=True))
        cls_ids = jax.lax.broadcasted_iota(jnp.int32, (n, c), 1)
        onehot = (cls_ids == labels).astype(jnp.float32)
        tgt = jnp.sum(shifted * onehot, axis=-1, keepdims=True)
        category_loss = jnp.mean(lse - tgt)
        # TODO(synk): out-of-range labels give target-logit 0 instead of erroring
        # like torch CrossEntropyLoss; labels are assumed valid.

        # ---- landmark MSE ----
        lm_d = lm_ref[...].astype(jnp.float32) - lm_gt_ref[...].astype(jnp.float32)
        landmark_loss = jnp.mean(lm_d * lm_d)

        # ---- heatmap MSE from streamed partial sums ----
        heatmap_loss = jnp.sum(part_ref[...]) * inv_heatmap_count

        out_ref[0, 0] = (0.5 * landmark_loss + 0.5 * heatmap_loss) * category_loss

    return kernel


def finger_loss(gesture, landmarks, heatmaps, gesture_gt, landmarks_gt, heatmap_gt,
                *, per_step_vmem_budget_bytes=6 * 1024 * 1024):
    """gesture: (N,C); gesture_gt: (N,) int; landmarks(_gt): same shape;
    heatmaps: sequence of arrays each with the same element count as heatmap_gt."""
    heatmaps = list(heatmaps)
    num_stages = len(heatmaps)
    assert num_stages >= 1
    m = int(heatmap_gt.size)
    for h in heatmaps:
        assert int(h.size) == m, "all heatmap stages must match heatmap_gt's size"
    itemsize = max(jnp.dtype(heatmap_gt.dtype).itemsize,
                   jnp.dtype(heatmaps[0].dtype).itemsize)

    # ---- plan streaming tiles for the heatmap MSE ----
    lane = _LANE
    rows8 = _round_up(pl.cdiv(m, lane), 8)         # rows after minimal (8*lane) alignment
    budget_rows = max(8, per_step_vmem_budget_bytes // ((num_stages + 1) * lane * itemsize))
    cap = min(budget_rows, 1024, rows8)
    max_tile = 8
    while max_tile * 2 <= cap:
        max_tile *= 2
    # Prefer a tile that divides rows8 (no extra padding / copy); otherwise pad.
    tile_rows = max_tile
    cand = max_tile
    while cand >= max(8, max_tile // 8):
        if rows8 % cand == 0:
            tile_rows = cand
            break
        cand //= 2
    rows_pad = _round_up(rows8, tile_rows)
    num_tiles = rows_pad // tile_rows
    m_pad = rows_pad * lane

    def to_2d(x):
        flat = x.reshape(-1)                       # free reshape of contiguous array
        if m_pad != m:
            # TODO(synk): zero-padding copies the stage once; shapes with
            # numel % (8*512) == 0 (the common NCHW case) keep this path cold.
            flat = jnp.pad(flat, (0, m_pad - m))
        return flat.reshape(rows_pad, lane)

    hm_gt2d = to_2d(heatmap_gt)                    # keep native dtype; upcast in-kernel
    hms2d = [to_2d(h) for h in heatmaps]

    per_step_bytes = (num_stages + 1) * tile_rows * lane * itemsize + 8 * lane * 4
    vmem_limit = int(min(48 * 1024 * 1024,
                         max(16 * 1024 * 1024, 2 * per_step_bytes + (4 << 20))))

    tile_spec = pl.BlockSpec((tile_rows, lane), lambda i: (i, 0))
    partials = pl.pallas_call(
        _make_heatmap_sse_kernel(num_stages, tile_rows, lane),
        out_shape=jax.ShapeDtypeStruct((num_tiles * 8, lane), jnp.float32),
        grid=(num_tiles,),
        in_specs=[tile_spec] * (num_stages + 1),
        out_specs=pl.BlockSpec((8, lane), lambda i: (i, 0)),
        compiler_params=pltpu.CompilerParams(
            dimension_semantics=("parallel",),
            vmem_limit_bytes=vmem_limit),
        cost_estimate=pl.CostEstimate(
            flops=3 * num_stages * m,
            transcendentals=0,
            bytes_accessed=(num_stages + 1) * m * itemsize + num_tiles * 8 * lane * 4),
    )(hm_gt2d, *hms2d)

    # ---- tiny finalize kernel: CE + landmark MSE + combine with heatmap partials ----
    n = gesture.shape[0]
    labels = gesture_gt.astype(jnp.int32).reshape(n, 1)
    lm = landmarks.reshape(n, -1)
    lm_gt = landmarks_gt.reshape(n, -1)

    vmem = pl.BlockSpec(memory_space=pltpu.MemorySpace.VMEM)
    out = pl.pallas_call(
        _make_finalize_kernel(1.0 / (num_stages * m)),
        out_shape=jax.ShapeDtypeStruct((1, 1), jnp.float32),
        in_specs=[vmem] * 5,
        out_specs=vmem,
    )(gesture, labels, lm, lm_gt, partials)
    return out[0, 0]


def _reference(gesture, landmarks, heatmaps, gesture_gt, landmarks_gt, heatmap_gt):
    # plain-JAX reference (matches torch semantics)
    lse = jax.nn.logsumexp(gesture, axis=-1)
    tgt = jnp.take_along_axis(gesture, gesture_gt[:, None], axis=-1)[:, 0]
    ce = jnp.mean(lse - tgt)
    lm = jnp.mean((landmarks - landmarks_gt) ** 2)
    hm = sum(jnp.mean((h - heatmap_gt) ** 2) for h in heatmaps) / len(heatmaps)
    return (0.5 * lm + 0.5 * hm) * ce


if __name__ == "__main__":
    # --- case 1: module-sized inputs (single heatmap tile) ---
    k1, k2, k3, k4, k5, k6 = jax.random.split(jax.random.PRNGKey(0), 6)
    N, C, L = 2, 10, 42
    HC, H, W, S = 4, 16, 16, 3
    gesture = jax.random.normal(k1, (N, C), dtype=jnp.float32)
    gesture_gt = jax.random.randint(k2, (N,), 0, C, dtype=jnp.int32)
    landmarks = jax.random.normal(k3, (N, L), dtype=jnp.float32)
    landmarks_gt = jax.random.normal(k4, (N, L), dtype=jnp.float32)
    heatmap_gt = jax.random.normal(k5, (N, HC, H, W), dtype=jnp.float32)
    heatmaps = [jax.random.normal(k, (N, HC, H, W), dtype=jnp.float32)
                for k in jax.random.split(k6, S)]

    loss = jax.block_until_ready(
        finger_loss(gesture, landmarks, heatmaps, gesture_gt, landmarks_gt, heatmap_gt))
    ref = _reference(gesture, landmarks, heatmaps, gesture_gt, landmarks_gt, heatmap_gt)
    assert jnp.allclose(loss, ref, rtol=1e-4, atol=1e-5), (loss, ref)

    # --- case 2: force multi-tile streaming (exercises grid / parallel partial sums) ---
    k1, k2, k3, k4, k5, k6 = jax.random.split(jax.random.PRNGKey(1), 6)
    N2, C2, L2 = 4, 10, 42
    HC2, H2, W2, S2 = 8, 32, 32, 2
    gesture2 = jax.random.normal(k1, (N2, C2), dtype=jnp.float32)
    gesture_gt2 = jax.random.randint(k2, (N2,), 0, C2, dtype=jnp.int32)
    landmarks2 = jax.random.normal(k3, (N2, L2), dtype=jnp.float32)
    landmarks_gt2 = jax.random.normal(k4, (N2, L2), dtype=jnp.float32)
    heatmap_gt2 = jax.random.normal(k5, (N2, HC2, H2, W2), dtype=jnp.float32)
    heatmaps2 = [jax.random.normal(k, (N2, HC2, H2, W2), dtype=jnp.float32)
                 for k in jax.random.split(k6, S2)]

    loss2 = jax.block_until_ready(
        finger_loss(gesture2, landmarks2, heatmaps2, gesture_gt2, landmarks_gt2,
                    heatmap_gt2, per_step_vmem_budget_bytes=64 * 1024))
    ref2 = _reference(gesture2, landmarks2, heatmaps2,
                      gesture_gt2, landmarks_gt2, heatmap_gt2)
    assert jnp.allclose(loss2, ref2, rtol=1e-4, atol=1e-5), (loss2, ref2)

    print("KERNEL_OK")
</pallas_src>

<mosaic_0001>
module attributes {stable_mosaic.version = 11 : i64} {
  func.func @kernel(%arg0: i32, %arg1: memref<8x512xf32, #tpu.memory_space<vmem>>, %arg2: memref<8x512xf32, #tpu.memory_space<vmem>>, %arg3: memref<8x512xf32, #tpu.memory_space<vmem>>, %arg4: memref<8x512xf32, #tpu.memory_space<vmem>>, %arg5: memref<8x512xf32, #tpu.memory_space<vmem>>) attributes {dimension_semantics = [#tpu.dimension_semantics<parallel>], iteration_bounds = array<i64: 1>, scalar_prefetch = 0 : i64, scratch_operands = 0 : i64, tpu.core_type = #tpu.core_type<tc>, window_params = [{transform_indices = @transform_0, window_bounds = array<i64: 8, 512>}, {transform_indices = @transform_1, window_bounds = array<i64: 8, 512>}, {transform_indices = @transform_2, window_bounds = array<i64: 8, 512>}, {transform_indices = @transform_3, window_bounds = array<i64: 8, 512>}, {transform_indices = @transform_4, window_bounds = array<i64: 8, 512>}]} {
    %c0 = arith.constant 0 : index
    %c0_0 = arith.constant 0 : index
    %0 = vector.load %arg1[%c0, %c0_0] : memref<8x512xf32, #tpu.memory_space<vmem>>, vector<8x512xf32>
    %cst = arith.constant 0.000000e+00 : f32
    %1 = vector.broadcast %cst : f32 to vector<8x512xf32>
    %c0_1 = arith.constant 0 : index
    %c0_2 = arith.constant 0 : index
    %2 = vector.load %arg2[%c0_1, %c0_2] : memref<8x512xf32, #tpu.memory_space<vmem>>, vector<8x512xf32>
    %3 = arith.subf %2, %0 : vector<8x512xf32>
    %4 = arith.mulf %3, %3 : vector<8x512xf32>
    %5 = arith.addf %1, %4 : vector<8x512xf32>
    %c0_3 = arith.constant 0 : index
    %c0_4 = arith.constant 0 : index
    %6 = vector.load %arg3[%c0_3, %c0_4] : memref<8x512xf32, #tpu.memory_space<vmem>>, vector<8x512xf32>
    %7 = arith.subf %6, %0 : vector<8x512xf32>
    %8 = arith.mulf %7, %7 : vector<8x512xf32>
    %9 = arith.addf %5, %8 : vector<8x512xf32>
    %c0_5 = arith.constant 0 : index
    %c0_6 = arith.constant 0 : index
    %10 = vector.load %arg4[%c0_5, %c0_6] : memref<8x512xf32, #tpu.memory_space<vmem>>, vector<8x512xf32>
    %11 = arith.subf %10, %0 : vector<8x512xf32>
    %12 = arith.mulf %11, %11 : vector<8x512xf32>
    %13 = arith.addf %9, %12 : vector<8x512xf32>
    %c0_7 = arith.constant 0 : index
    %c0_8 = arith.constant 0 : index
    %14 = vector.load %arg5[%c0_7, %c0_8] : memref<8x512xf32, #tpu.memory_space<vmem>>, vector<8x512xf32>
    tpu.vector_store %arg5[%c0_7, %c0_8], %13 {strides = array<i32>} : memref<8x512xf32, #tpu.memory_space<vmem>>, vector<8x512xf32>,
    return
  }
  func.func @transform_0(%arg0: i32) -> (i32, i32) {
    %c0_i32 = arith.constant 0 : i32
    %c0_i32_0 = arith.constant 0 : i32
    return %arg0, %c0_i32 : i32, i32
  }
  func.func @transform_1(%arg0: i32) -> (i32, i32) {
    %c0_i32 = arith.constant 0 : i32
    %c0_i32_0 = arith.constant 0 : i32
    return %arg0, %c0_i32 : i32, i32
  }
  func.func @transform_2(%arg0: i32) -> (i32, i32) {
    %c0_i32 = arith.constant 0 : i32
    %c0_i32_0 = arith.constant 0 : i32
    return %arg0, %c0_i32 : i32, i32
  }
  func.func @transform_3(%arg0: i32) -> (i32, i32) {
    %c0_i32 = arith.constant 0 : i32
    %c0_i32_0 = arith.constant 0 : i32
    return %arg0, %c0_i32 : i32, i32
  }
  func.func @transform_4(%arg0: i32) -> (i32, i32) {
    %c0_i32 = arith.constant 0 : i32
    %c0_i32_0 = arith.constant 0 : i32
    return %arg0, %c0_i32 : i32, i32
  }
}

</mosaic_0001>

<llo_original>
// kernel: tpu_custom_call.1
$region0: #{tpu_custom_call.1}
  #allocation0 [shape = 'u32[]', space=smem, size = 0x4, offset = 0x4, fixed_abs, tag = 'smem constant byte address 0x4 - core index']
  #allocation1 [shape = 'u32[144,128]{1,0:T(1,128)}', space=vmem, size = 0x12000, scoped, tag = 'internal scratch']
  %s0 = inlined_call_operand.hbm [shape: f32[8,512], index: 0, kind: input, shape index: {}]
  %s1 = inlined_call_operand.hbm [shape: f32[8,512], index: 1, kind: input, shape index: {}]
  %s2 = inlined_call_operand.hbm [shape: f32[8,512], index: 2, kind: input, shape index: {}]
  %s3 = inlined_call_operand.hbm [shape: f32[8,512], index: 3, kind: input, shape index: {}]
  %s4 = inlined_call_operand.hbm [shape: f32[8,512], index: 4, kind: output, shape index: {}]
  %s5 = sld [smem:[#allocation0]]
  $region42: #{tpu_custom_call.1} parent=0
    _
  %s7 = ssub.s32 1, %s5
  %s8 = scalar_select 0, %s7, %s5
  $region1: #{tpu_custom_call.1} parent=0
    #allocation2 [shape = 'u8[16384]{0}', space=vmem, size = 0x4000, scoped, tag = 'input window, operand 0, single buffered']
    #allocation3 [shape = 's32[1]{0}', space=sflag, size = 0x4, scoped, tag = 'scoped memory for tpu_custom_call.1']
    #allocation4 [shape = 's32[1]{0}', space=sflag, size = 0x4, scoped, tag = 'scoped memory for tpu_custom_call.1']
    #allocation5 [shape = 'u8[16384]{0}', space=vmem, size = 0x4000, scoped, tag = 'input window, operand 1, single buffered']
    #allocation6 [shape = 's32[1]{0}', space=sflag, size = 0x4, scoped, tag = 'scoped memory for tpu_custom_call.1']
    #allocation7 [shape = 'u8[16384]{0}', space=vmem, size = 0x4000, scoped, tag = 'input window, operand 2, single buffered']
    #allocation8 [shape = 'u8[16384]{0}', space=vmem, size = 0x4000, scoped, tag = 'input window, operand 3, single buffered']
    #allocation9 [shape = 's32[1]{0}', space=sflag, size = 0x4, scoped, tag = 'scoped memory for tpu_custom_call.1']
    #allocation10 [shape = 'u8[16384]{0}', space=vmem, size = 0x4000, scoped, tag = 'output window, operand 0, single buffered']
    %9 = vsyncpa [#allocation3], 0
    %10 = vsyncpa [#allocation6], 0
    %11 = vsyncpa [#allocation9], 0
    %12 = vsyncpa [#allocation4], 0
    // Predicated region
    $region2: #{tpu_custom_call.1} parent=1 // pred_check
      _
    $region3: #{tpu_custom_call.1} parent=1 // pred_check_branch
      %14 = sbr.rel (0) target = $region5
    $region4: #{tpu_custom_call.1} parent=1 // pred_region
      %s16 = ssub.s32 512, 512
      %17 = vsyncadd [#allocation3], %s16
      %s19 = sshll.u32 [#allocation2], 4
      %s20 = int_to_ptr.vmem [resolvable:$true] %s19
      %22 = dma.hbm_to_vmem [thread:$0]  %s0, 512, %s20, [#allocation3]
    $region5: #{tpu_custom_call.1} parent=1 // pred_fallthru
      _
    // Predicated region
    $region6: #{tpu_custom_call.1} parent=1 // pred_check
      _
    $region7: #{tpu_custom_call.1} parent=1 // pred_check_branch
      %24 = sbr.rel (0) target = $region9
    $region8: #{tpu_custom_call.1} parent=1 // pred_region
      %s26 = ssub.s32 512, 512
      %27 = vsyncadd [#allocation6], %s26
      %s29 = sshll.u32 [#allocation5], 4
      %s30 = int_to_ptr.vmem [resolvable:$true] %s29
      %32 = dma.hbm_to_vmem [thread:$0]  %s1, 512, %s30, [#allocation6]
    $region9: #{tpu_custom_call.1} parent=1 // pred_fallthru
      _
    // Predicated region
    $region10: #{tpu_custom_call.1} parent=1 // pred_check
      _
    $region11: #{tpu_custom_call.1} parent=1 // pred_check_branch
      %34 = sbr.rel (0) target = $region13
    $region12: #{tpu_custom_call.1} parent=1 // pred_region
      %s36 = ssub.s32 512, 512
      %37 = vsyncadd [#allocation6], %s36
      %s39 = sshll.u32 [#allocation7], 4
      %s40 = int_to_ptr.vmem [resolvable:$true] %s39
      %42 = dma.hbm_to_vmem [thread:$0]  %s2, 512, %s40, [#allocation6]
    $region13: #{tpu_custom_call.1} parent=1 // pred_fallthru
      _
    // Predicated region
    $region14: #{tpu_custom_call.1} parent=1 // pred_check
      _
    $region15: #{tpu_custom_call.1} parent=1 // pred_check_branch
      %44 = sbr.rel (0) target = $region17
    $region16: #{tpu_custom_call.1} parent=1 // pred_region
      %s46 = ssub.s32 512, 512
      %47 = vsyncadd [#allocation9], %s46
      %s49 = sshll.u32 [#allocation8], 4
      %s50 = int_to_ptr.vmem [resolvable:$true] %s49
      %52 = dma.hbm_to_vmem [thread:$0]  %s3, 512, %s50, [#allocation9]
    $region17: #{tpu_custom_call.1} parent=1 // pred_fallthru
      _
    // Predicated region
    $region18: #{tpu_custom_call.1} parent=1 // pred_check
      _
    $region19: #{tpu_custom_call.1} parent=1 // pred_check_branch
      %54 = sbr.rel (0) target = $region21
    $region20: #{tpu_custom_call.1} parent=1 // pred_region
      %55 = dma.done [#allocation3], 512
    $region21: #{tpu_custom_call.1} parent=1 // pred_fallthru
      _
    // Predicated region
    $region22: #{tpu_custom_call.1} parent=1 // pred_check
      _
    $region23: #{tpu_custom_call.1} parent=1 // pred_check_branch
      %57 = sbr.rel (0) target = $region25
    $region24: #{tpu_custom_call.1} parent=1 // pred_region
      %58 = dma.done [#allocation6], 512
    $region25: #{tpu_custom_call.1} parent=1 // pred_fallthru
      _
    // Predicated region
    $region26: #{tpu_custom_call.1} parent=1 // pred_check
      _
    $region27: #{tpu_custom_call.1} parent=1 // pred_check_branch
      %60 = sbr.rel (0) target = $region29
    $region28: #{tpu_custom_call.1} parent=1 // pred_region
      %61 = dma.done [#allocation6], 512
    $region29: #{tpu_custom_call.1} parent=1 // pred_fallthru
      _
    // Predicated region
    $region30: #{tpu_custom_call.1} parent=1 // pred_check
      _
    $region31: #{tpu_custom_call.1} parent=1 // pred_check_branch
      %63 = sbr.rel (0) target = $region33
    $region32: #{tpu_custom_call.1} parent=1 // pred_region
      %64 = dma.done [#allocation9], 512
    $region33: #{tpu_custom_call.1} parent=1 // pred_fallthru
      _
    %v65 = vld [vmem:[#allocation2] sm:$0xff]
    %v66 = vld [vmem:[#allocation2 + $0x8] sm:$0xff]
    %v67 = vld [vmem:[#allocation2 + $0x10] sm:$0xff]
    %v68 = vld [vmem:[#allocation2 + $0x18] sm:$0xff]
    %v69 = vld [vmem:[#allocation5] sm:$0xff]
    %v70 = vld [vmem:[#allocation5 + $0x8] sm:$0xff]
    %v71 = vld [vmem:[#allocation5 + $0x10] sm:$0xff]
    %v72 = vld [vmem:[#allocation5 + $0x18] sm:$0xff]
    %v73 = vsub.f32 %v69, %v65
    %v74 = vsub.f32 %v70, %v66
    %v75 = vsub.f32 %v71, %v67
    %v76 = vsub.f32 %v72, %v68
    %v77 = vmul.f32 %v73, %v73
    %v78 = vmul.f32 %v74, %v74
    %v79 = vmul.f32 %v75, %v75
    %v80 = vmul.f32 %v76, %v76
    %v81 = vadd.f32 %v77, 0.0
    %v82 = vadd.f32 %v78, 0.0
    %v83 = vadd.f32 %v79, 0.0
    %v84 = vadd.f32 %v80, 0.0
    %v85 = vld [vmem:[#allocation7] sm:$0xff]
    %v86 = vld [vmem:[#allocation7 + $0x8] sm:$0xff]
    %v87 = vld [vmem:[#allocation7 + $0x10] sm:$0xff]
    %v88 = vld [vmem:[#allocation7 + $0x18] sm:$0xff]
    %v89 = vsub.f32 %v85, %v65
    %v90 = vsub.f32 %v86, %v66
    %v91 = vsub.f32 %v87, %v67
    %v92 = vsub.f32 %v88, %v68
    %v93 = vmul.f32 %v89, %v89
    %v94 = vmul.f32 %v90, %v90
    %v95 = vmul.f32 %v91, %v91
    %v96 = vmul.f32 %v92, %v92
    %v97 = vadd.f32 %v81, %v93
    %v98 = vadd.f32 %v82, %v94
    %v99 = vadd.f32 %v83, %v95
    %v100 = vadd.f32 %v84, %v96
    %v101 = vld [vmem:[#allocation8] sm:$0xff]
    %v102 = vld [vmem:[#allocation8 + $0x8] sm:$0xff]
    %v103 = vld [vmem:[#allocation8 + $0x10] sm:$0xff]
    %v104 = vld [vmem:[#allocation8 + $0x18] sm:$0xff]
    %v105 = vsub.f32 %v101, %v65
    %v106 = vsub.f32 %v102, %v66
    %v107 = vsub.f32 %v103, %v67
    %v108 = vsub.f32 %v104, %v68
    %v109 = vmul.f32 %v105, %v105
    %v110 = vmul.f32 %v106, %v106
    %v111 = vmul.f32 %v107, %v107
    %v112 = vmul.f32 %v108, %v108
    %v113 = vadd.f32 %v97, %v109
    %v114 = vadd.f32 %v98, %v110
    %v115 = vadd.f32 %v99, %v111
    %v116 = vadd.f32 %v100, %v112
    %117 = vst [vmem:[#allocation10] sm:$0xff] %v113
    %118 = vst [vmem:[#allocation10 + $0x8] sm:$0xff] %v114
    %119 = vst [vmem:[#allocation10 + $0x10] sm:$0xff] %v115
    %120 = vst [vmem:[#allocation10 + $0x18] sm:$0xff] %v116
    // Predicated region
    $region34: #{tpu_custom_call.1} parent=1 // pred_check
      _
    $region35: #{tpu_custom_call.1} parent=1 // pred_check_branch
      %122 = sbr.rel (0) target = $region37
    $region36: #{tpu_custom_call.1} parent=1 // pred_region
      %s124 = ssub.s32 512, 512
      %125 = vsyncadd [#allocation4], %s124
      %s127 = sshll.u32 [#allocation10], 4
      %s128 = int_to_ptr.vmem [resolvable:$true] %s127
      %130 = dma.vmem_to_hbm [thread:$0]  %s128, 512, %s4, [#allocation4]
    $region37: #{tpu_custom_call.1} parent=1 // pred_fallthru
      _
    // Predicated region
    $region38: #{tpu_custom_call.1} parent=1 // pred_check
      _
    $region39: #{tpu_custom_call.1} parent=1 // pred_check_branch
      %132 = sbr.rel (0) target = $region41
    $region40: #{tpu_custom_call.1} parent=1 // pred_region
      %133 = dma.done [#allocation4], 512
    $region41: #{tpu_custom_call.1} parent=1 // pred_fallthru
      _
    %134 = vsyncpa [#allocation3], 1
    %135 = vsyncpa [#allocation6], 1
    %136 = vsyncpa [#allocation9], 1
    %137 = vsyncpa [#allocation4], 1

</llo_original>
